<compile_context>
chip_gen: v7x
topology: tpu7x:2x2x1
jax: 0.10.0
libtpu: 0.0.40
codegen_flags: <defaults>
</compile_context>

<pallas_src>
import numpy as np
import jax
import jax.numpy as jnp
from jax.experimental import pallas as pl
from jax.experimental.pallas import tpu as pltpu

HIDDEN = 32
LEAKY_SLOPE = 0.01
BN_EPS = 1e-5
ROW_TILE_CAP = 256   # node-row tile cap for large N (keeps A's VMEM block bounded)


def _temporal_gnn_kernel(
    probs_ref,   # SMEM (P,)            softmax(attention), scalar-prefetched
    a_ref,       # VMEM (row_tile, N)   rows of normalized adjacency
    xw_ref,      # VMEM (P, N, 64)      per-period X[:,:,p] @ W_eff  ([z | h] fused)
    b_ref,       # VMEM (1, 64)         fused effective bias  [bz_eff | bh_eff]
    lw_ref,      # VMEM (32, OUT_PAD)   BN-folded final Linear weight (lane-padded)
    lb_ref,      # VMEM (1, OUT_PAD)    BN-folded final Linear bias   (lane-padded)
    out_ref,     # VMEM (row_tile, OUT_PAD)
):
    num_periods = xw_ref.shape[0]
    a = a_ref[...]                       # (row_tile, N)
    b = b_ref[...]                       # (1, 64)
    rows = a.shape[0]

    def body(p, acc):
        # Single MXU matmul per period: rows of A against the fused 64-wide activations.
        g = jnp.dot(a, xw_ref[p], preferred_element_type=jnp.float32) + b   # (rows, 64)
        z = jax.nn.sigmoid(g[:, :HIDDEN])          # update gate
        ht = jnp.tanh(g[:, HIDDEN:])               # candidate state
        # H == 0 every period (A3TGCN called with H=None), so H_p = (1 - z) * ht.
        return acc + probs_ref[p] * (1.0 - z) * ht

    acc = jax.lax.fori_loop(
        0, num_periods, body,
        jnp.zeros((rows, HIDDEN), jnp.float32),
        unroll=True,
    )

    h = jnp.where(acc >= 0.0, acc, LEAKY_SLOPE * acc)   # F.leaky_relu
    # BatchNorm1d (eval, running stats) is folded into lw/lb in the wrapper.
    # TODO(synk): Dropout(p=0.5) is stochastic in train mode; identity (eval) here.
    out_ref[...] = (jnp.dot(h, lw_ref[...], preferred_element_type=jnp.float32)
                    + lb_ref[...])


def build_norm_adj(edge_index, num_nodes):
    """Dense D^{-1/2}(A + I)D^{-1/2}, matching GCNConv's gcn_norm with add_self_loops=True.

    Note: duplicate edges in edge_index are scatter-added; this matches gcn_norm only for
    deduplicated edge lists (the usual torch_geometric convention).
    """
    src = jnp.concatenate([edge_index[0], jnp.arange(num_nodes, dtype=edge_index.dtype)])
    dst = jnp.concatenate([edge_index[1], jnp.arange(num_nodes, dtype=edge_index.dtype)])
    w = jnp.ones(src.shape[0], jnp.float32)
    deg = jnp.zeros((num_nodes,), jnp.float32).at[dst].add(w)
    dinv = jnp.where(deg > 0, jax.lax.rsqrt(deg), 0.0)
    norm = dinv[src] * dinv[dst] * w
    # A_hat[i, j] = norm of edge (j -> i) so that A_hat @ X aggregates incoming messages.
    return jnp.zeros((num_nodes, num_nodes), jnp.float32).at[dst, src].add(norm)


def temporal_gnn_pallas(x, edge_index, params):
    N, F, P = x.shape
    x = x.astype(jnp.float32)
    a_hat = build_norm_adj(edge_index, N)                          # (N, N)
    probs = jax.nn.softmax(params["attention"].astype(jnp.float32))

    f32 = lambda k: params[k].astype(jnp.float32)

    # ---- one-shot algebraic folding in the XLA wrapper ----------------------------------
    # z_pre = (A@X@wz + bz) @ lwz_top + lbz  ==  A @ (X @ (wz@lwz_top)) + (bz@lwz_top + lbz)
    # (the r-gate and all H-terms are identically zero because H is None every period).
    lwz_top = f32("lwz")[:HIDDEN, :]                                # (32, 32)
    lwh_top = f32("lwh")[:HIDDEN, :]
    w_eff = jnp.concatenate([f32("wz") @ lwz_top, f32("wh") @ lwh_top], axis=1)     # (F, 64)
    b_eff = jnp.concatenate([f32("bz") @ lwz_top + f32("lbz"),
                             f32("bh") @ lwh_top + f32("lbh")], axis=1)             # (1, 64)

    # Lane-dense per-period activations for the kernel: XW[p] = X[:, :, p] @ W_eff.
    # (For large N, cast xw / a_hat to bfloat16 here; keep preferred_element_type=f32.)
    xw = jnp.einsum("nfp,fg->png", x, w_eff)                        # (P, N, 64)

    # Fold BatchNorm1d (eval) into the final Linear and pad its output lanes to 128
    # so the kernel's only store is a full-lane write.
    scale = f32("bn_gamma") * jax.lax.rsqrt(f32("bn_var") + BN_EPS)      # (1, 32)
    shift = f32("bn_beta") - f32("bn_mean") * scale                      # (1, 32)
    lin_w_eff = f32("lin_w") * scale.T                                   # (32, P)
    lin_b_eff = shift @ f32("lin_w") + f32("lin_b")                      # (1, P)

    out_pad = pl.cdiv(P, 128) * 128
    lin_w_pad = jnp.zeros((HIDDEN, out_pad), jnp.float32).at[:, :P].set(lin_w_eff)
    lin_b_pad = jnp.zeros((1, out_pad), jnp.float32).at[:, :P].set(lin_b_eff)

    # ---- node-row tiling (keeps A's VMEM block bounded; "parallel" for megacore) --------
    if N <= ROW_TILE_CAP:
        row_tile, n_pad = N, N
    else:
        row_tile = ROW_TILE_CAP
        n_pad = pl.cdiv(N, row_tile) * row_tile
        a_hat = jnp.zeros((n_pad, N), jnp.float32).at[:N, :].set(a_hat)
    num_tiles = n_pad // row_tile

    grid_spec = pltpu.PrefetchScalarGridSpec(
        num_scalar_prefetch=1,            # probs -> SMEM, available to index_maps + kernel
        grid=(num_tiles,),
        in_specs=[
            pl.BlockSpec((row_tile, N), lambda i, probs: (i, 0)),                 # A rows
            pl.BlockSpec((P, N, 2 * HIDDEN), lambda i, probs: (0, 0, 0)),         # XW (resident)
            pl.BlockSpec((1, 2 * HIDDEN), lambda i, probs: (0, 0)),               # b_eff
            pl.BlockSpec((HIDDEN, out_pad), lambda i, probs: (0, 0)),             # lin_w (folded BN)
            pl.BlockSpec((1, out_pad), lambda i, probs: (0, 0)),                  # lin_b (folded BN)
        ],
        out_specs=pl.BlockSpec((row_tile, out_pad), lambda i, probs: (i, 0)),
    )

    out = pl.pallas_call(
        _temporal_gnn_kernel,
        out_shape=jax.ShapeDtypeStruct((n_pad, out_pad), jnp.float32),
        grid_spec=grid_spec,
        compiler_params=pltpu.CompilerParams(dimension_semantics=("parallel",)),
    )(probs, a_hat, xw, b_eff, lin_w_pad, lin_b_pad)

    return out[:N, :P]


def temporal_gnn_reference(x, edge_index, params):
    """Plain-JAX reference mirroring the PyTorch forward (eval mode), un-fused/un-folded."""
    N, F, P = x.shape
    a_hat = build_norm_adj(edge_index, N)
    probs = jax.nn.softmax(params["attention"])
    h0 = jnp.zeros((N, HIDDEN), jnp.float32)
    acc = jnp.zeros((N, HIDDEN), jnp.float32)
    for p in range(P):
        xp = x[:, :, p]
        cz = a_hat @ (xp @ params["wz"]) + params["bz"]
        cr = a_hat @ (xp @ params["wr"]) + params["br"]
        ch = a_hat @ (xp @ params["wh"]) + params["bh"]
        z = jax.nn.sigmoid(jnp.concatenate([cz, h0], axis=1) @ params["lwz"] + params["lbz"])
        r = jax.nn.sigmoid(jnp.concatenate([cr, h0], axis=1) @ params["lwr"] + params["lbr"])
        ht = jnp.tanh(jnp.concatenate([ch, h0 * r], axis=1) @ params["lwh"] + params["lbh"])
        hp = z * h0 + (1.0 - z) * ht
        acc = acc + probs[p] * hp
    h = jnp.where(acc >= 0.0, acc, LEAKY_SLOPE * acc)
    h = (h - params["bn_mean"]) * (params["bn_gamma"] * jax.lax.rsqrt(params["bn_var"] + BN_EPS)) \
        + params["bn_beta"]
    return h @ params["lin_w"] + params["lin_b"]


def init_params(key, node_features, periods):
    ks = jax.random.split(key, 17)
    f = node_features

    def rnd(k, shape, scale=0.1):
        return (scale * jax.random.normal(k, shape)).astype(jnp.float32)

    return dict(
        attention=rnd(ks[0], (periods,), 1.0),
        wz=rnd(ks[1], (f, HIDDEN)), bz=rnd(ks[2], (1, HIDDEN)),
        wr=rnd(ks[3], (f, HIDDEN)), br=rnd(ks[4], (1, HIDDEN)),
        wh=rnd(ks[5], (f, HIDDEN)), bh=rnd(ks[6], (1, HIDDEN)),
        lwz=rnd(ks[7], (2 * HIDDEN, HIDDEN)), lbz=rnd(ks[8], (1, HIDDEN)),
        lwr=rnd(ks[9], (2 * HIDDEN, HIDDEN)), lbr=rnd(ks[10], (1, HIDDEN)),
        lwh=rnd(ks[11], (2 * HIDDEN, HIDDEN)), lbh=rnd(ks[12], (1, HIDDEN)),
        bn_gamma=jnp.ones((1, HIDDEN), jnp.float32),
        bn_beta=jnp.zeros((1, HIDDEN), jnp.float32),
        bn_mean=rnd(ks[13], (1, HIDDEN)),
        bn_var=(jnp.abs(rnd(ks[14], (1, HIDDEN))) + 1.0).astype(jnp.float32),
        lin_w=rnd(ks[15], (HIDDEN, periods)),
        lin_b=rnd(ks[16], (1, periods)),
    )


if __name__ == "__main__":
    N, F, P = 16, 4, 8   # num_nodes, node_features, periods

    key = jax.random.PRNGKey(0)
    kx, kp = jax.random.split(key)
    x = jax.random.normal(kx, (N, F, P), dtype=jnp.float32)      # same layout as PyTorch input
    params = init_params(kp, F, P)

    # Deterministic ring graph: i <-> (i+1) % N
    nodes = np.arange(N)
    src = np.concatenate([nodes, (nodes + 1) % N])
    dst = np.concatenate([(nodes + 1) % N, nodes])
    edge_index = jnp.asarray(np.stack([src, dst]), dtype=jnp.int32)   # (2, 2N)

    out = jax.block_until_ready(temporal_gnn_pallas(x, edge_index, params))
    ref = jax.block_until_ready(temporal_gnn_reference(x, edge_index, params))

    np.testing.assert_allclose(np.asarray(out), np.asarray(ref), rtol=2e-4, atol=2e-5)
    assert out.shape == (N, P)
    print("KERNEL_OK")
</pallas_src>

<mosaic_0001>
module attributes {stable_mosaic.version = 11 : i64} {
  func.func @_temporal_gnn_kernel(%arg0: i32, %arg1: memref<8xf32, #tpu.memory_space<smem>>, %arg2: memref<16x16xf32, #tpu.memory_space<vmem>>, %arg3: memref<8x16x64xf32, #tpu.memory_space<vmem>>, %arg4: memref<1x64xf32, #tpu.memory_space<vmem>>, %arg5: memref<32x128xf32, #tpu.memory_space<vmem>>, %arg6: memref<1x128xf32, #tpu.memory_space<vmem>>, %arg7: memref<16x128xf32, #tpu.memory_space<vmem>>) attributes {dimension_semantics = [#tpu.dimension_semantics<parallel>], iteration_bounds = array<i64: 1>, scalar_prefetch = 1 : i64, scratch_operands = 0 : i64, tpu.core_type = #tpu.core_type<tc>, window_params = [{transform_indices = @transform_0, window_bounds = array<i64: 16, 16>}, {pipeline_mode = #tpu.pipeline_mode<synchronous>, transform_indices = @transform_1, window_bounds = array<i64: 8, 16, 64>}, {pipeline_mode = #tpu.pipeline_mode<synchronous>, transform_indices = @transform_2, window_bounds = array<i64: 1, 64>}, {pipeline_mode = #tpu.pipeline_mode<synchronous>, transform_indices = @transform_3, window_bounds = array<i64: 32, 128>}, {pipeline_mode = #tpu.pipeline_mode<synchronous>, transform_indices = @transform_4, window_bounds = array<i64: 1, 128>}, {transform_indices = @transform_5, window_bounds = array<i64: 16, 128>}]} {
    %c0 = arith.constant 0 : index
    %c0_0 = arith.constant 0 : index
    %0 = vector.load %arg2[%c0, %c0_0] : memref<16x16xf32, #tpu.memory_space<vmem>>, vector<16x16xf32>
    %c0_1 = arith.constant 0 : index
    %c0_2 = arith.constant 0 : index
    %1 = vector.load %arg4[%c0_1, %c0_2] : memref<1x64xf32, #tpu.memory_space<vmem>>, vector<1x64xf32>
    %cst = arith.constant 0.000000e+00 : f32
    %2 = vector.broadcast %cst : f32 to vector<16x32xf32>
    %c0_i32 = arith.constant 0 : i32
    %3 = arith.index_cast %c0_i32 : i32 to index
    %c0_3 = arith.constant 0 : index
    %c0_4 = arith.constant 0 : index
    %4 = vector.load %arg3[%3, %c0_3, %c0_4] : memref<8x16x64xf32, #tpu.memory_space<vmem>>, vector<1x16x64xf32>
    %5 = vector.shape_cast %4 : vector<1x16x64xf32> to vector<16x64xf32>
    %cst_5 = arith.constant dense<0.000000e+00> : vector<16x64xf32>
    %6 = tpu.matmul %0, %5, %cst_5 {dimension_numbers = #tpu.dot_dimension_numbers<[1], [0], [0], [1], [0, 0, 1, 1], [], []>} : vector<16x16xf32>, vector<16x64xf32>, vector<16x64xf32> -> vector<16x64xf32>
    %7 = vector.broadcast %1 : vector<1x64xf32> to vector<16x64xf32>
    %8 = arith.addf %6, %7 : vector<16x64xf32>
    %9 = vector.extract_strided_slice %8 {offsets = [0, 0], sizes = [16, 32], strides = [1, 1]} : vector<16x64xf32> to vector<16x32xf32>
    %10 = arith.negf %9 : vector<16x32xf32>
    %11 = math.exp %10 : vector<16x32xf32>
    %cst_6 = arith.constant 1.000000e+00 : f32
    %12 = vector.broadcast %cst_6 : f32 to vector<16x32xf32>
    %13 = arith.addf %12, %11 : vector<16x32xf32>
    %14 = arith.divf %12, %13 : vector<16x32xf32>
    %15 = vector.extract_strided_slice %8 {offsets = [0, 32], sizes = [16, 32], strides = [1, 1]} : vector<16x64xf32> to vector<16x32xf32>
    %16 = math.tanh %15 : vector<16x32xf32>
    %17 = arith.index_cast %c0_i32 : i32 to index
    %18 = memref.load %arg1[%17] : memref<8xf32, #tpu.memory_space<smem>>
    %cst_7 = arith.constant 1.000000e+00 : f32
    %19 = vector.broadcast %cst_7 : f32 to vector<16x32xf32>
    %20 = arith.subf %19, %14 : vector<16x32xf32>
    %21 = vector.broadcast %18 : f32 to vector<16x32xf32>
    %22 = arith.mulf %21, %20 : vector<16x32xf32>
    %23 = arith.mulf %22, %16 : vector<16x32xf32>
    %24 = arith.addf %2, %23 : vector<16x32xf32>
    %c1_i32 = arith.constant 1 : i32
    %25 = arith.index_cast %c1_i32 : i32 to index
    %c0_8 = arith.constant 0 : index
    %c0_9 = arith.constant 0 : index
    %26 = vector.load %arg3[%25, %c0_8, %c0_9] : memref<8x16x64xf32, #tpu.memory_space<vmem>>, vector<1x16x64xf32>
    %27 = vector.shape_cast %26 : vector<1x16x64xf32> to vector<16x64xf32>
    %cst_10 = arith.constant dense<0.000000e+00> : vector<16x64xf32>
    %28 = tpu.matmul %0, %27, %cst_10 {dimension_numbers = #tpu.dot_dimension_numbers<[1], [0], [0], [1], [0, 0, 1, 1], [], []>} : vector<16x16xf32>, vector<16x64xf32>, vector<16x64xf32> -> vector<16x64xf32>
    %29 = vector.broadcast %1 : vector<1x64xf32> to vector<16x64xf32>
    %30 = arith.addf %28, %29 : vector<16x64xf32>
    %31 = vector.extract_strided_slice %30 {offsets = [0, 0], sizes = [16, 32], strides = [1, 1]} : vector<16x64xf32> to vector<16x32xf32>
    %32 = arith.negf %31 : vector<16x32xf32>
    %33 = math.exp %32 : vector<16x32xf32>
    %cst_11 = arith.constant 1.000000e+00 : f32
    %34 = vector.broadcast %cst_11 : f32 to vector<16x32xf32>
    %35 = arith.addf %34, %33 : vector<16x32xf32>
    %36 = arith.divf %34, %35 : vector<16x32xf32>
    %37 = vector.extract_strided_slice %30 {offsets = [0, 32], sizes = [16, 32], strides = [1, 1]} : vector<16x64xf32> to vector<16x32xf32>
    %38 = math.tanh %37 : vector<16x32xf32>
    %39 = arith.index_cast %c1_i32 : i32 to index
    %40 = memref.load %arg1[%39] : memref<8xf32, #tpu.memory_space<smem>>
    %cst_12 = arith.constant 1.000000e+00 : f32
    %41 = vector.broadcast %cst_12 : f32 to vector<16x32xf32>
    %42 = arith.subf %41, %36 : vector<16x32xf32>
    %43 = vector.broadcast %40 : f32 to vector<16x32xf32>
    %44 = arith.mulf %43, %42 : vector<16x32xf32>
    %45 = arith.mulf %44, %38 : vector<16x32xf32>
    %46 = arith.addf %24, %45 : vector<16x32xf32>
    %c2_i32 = arith.constant 2 : i32
    %47 = arith.index_cast %c2_i32 : i32 to index
    %c0_13 = arith.constant 0 : index
    %c0_14 = arith.constant 0 : index
    %48 = vector.load %arg3[%47, %c0_13, %c0_14] : memref<8x16x64xf32, #tpu.memory_space<vmem>>, vector<1x16x64xf32>
    %49 = vector.shape_cast %48 : vector<1x16x64xf32> to vector<16x64xf32>
    %cst_15 = arith.constant dense<0.000000e+00> : vector<16x64xf32>
    %50 = tpu.matmul %0, %49, %cst_15 {dimension_numbers = #tpu.dot_dimension_numbers<[1], [0], [0], [1], [0, 0, 1, 1], [], []>} : vector<16x16xf32>, vector<16x64xf32>, vector<16x64xf32> -> vector<16x64xf32>
    %51 = vector.broadcast %1 : vector<1x64xf32> to vector<16x64xf32>
    %52 = arith.addf %50, %51 : vector<16x64xf32>
    %53 = vector.extract_strided_slice %52 {offsets = [0, 0], sizes = [16, 32], strides = [1, 1]} : vector<16x64xf32> to vector<16x32xf32>
    %54 = arith.negf %53 : vector<16x32xf32>
    %55 = math.exp %54 : vector<16x32xf32>
    %cst_16 = arith.constant 1.000000e+00 : f32
    %56 = vector.broadcast %cst_16 : f32 to vector<16x32xf32>
    %57 = arith.addf %56, %55 : vector<16x32xf32>
    %58 = arith.divf %56, %57 : vector<16x32xf32>
    %59 = vector.extract_strided_slice %52 {offsets = [0, 32], sizes = [16, 32], strides = [1, 1]} : vector<16x64xf32> to vector<16x32xf32>
    %60 = math.tanh %59 : vector<16x32xf32>
    %61 = arith.index_cast %c2_i32 : i32 to index
    %62 = memref.load %arg1[%61] : memref<8xf32, #tpu.memory_space<smem>>
    %cst_17 = arith.constant 1.000000e+00 : f32
    %63 = vector.broadcast %cst_17 : f32 to vector<16x32xf32>
    %64 = arith.subf %63, %58 : vector<16x32xf32>
    %65 = vector.broadcast %62 : f32 to vector<16x32xf32>
    %66 = arith.mulf %65, %64 : vector<16x32xf32>
    %67 = arith.mulf %66, %60 : vector<16x32xf32>
    %68 = arith.addf %46, %67 : vector<16x32xf32>
    %c3_i32 = arith.constant 3 : i32
    %69 = arith.index_cast %c3_i32 : i32 to index
    %c0_18 = arith.constant 0 : index
    %c0_19 = arith.constant 0 : index
    %70 = vector.load %arg3[%69, %c0_18, %c0_19] : memref<8x16x64xf32, #tpu.memory_space<vmem>>, vector<1x16x64xf32>
    %71 = vector.shape_cast %70 : vector<1x16x64xf32> to vector<16x64xf32>
    %cst_20 = arith.constant dense<0.000000e+00> : vector<16x64xf32>
    %72 = tpu.matmul %0, %71, %cst_20 {dimension_numbers = #tpu.dot_dimension_numbers<[1], [0], [0], [1], [0, 0, 1, 1], [], []>} : vector<16x16xf32>, vector<16x64xf32>, vector<16x64xf32> -> vector<16x64xf32>
    %73 = vector.broadcast %1 : vector<1x64xf32> to vector<16x64xf32>
    %74 = arith.addf %72, %73 : vector<16x64xf32>
    %75 = vector.extract_strided_slice %74 {offsets = [0, 0], sizes = [16, 32], strides = [1, 1]} : vector<16x64xf32> to vector<16x32xf32>
    %76 = arith.negf %75 : vector<16x32xf32>
    %77 = math.exp %76 : vector<16x32xf32>
    %cst_21 = arith.constant 1.000000e+00 : f32
    %78 = vector.broadcast %cst_21 : f32 to vector<16x32xf32>
    %79 = arith.addf %78, %77 : vector<16x32xf32>
    %80 = arith.divf %78, %79 : vector<16x32xf32>
    %81 = vector.extract_strided_slice %74 {offsets = [0, 32], sizes = [16, 32], strides = [1, 1]} : vector<16x64xf32> to vector<16x32xf32>
    %82 = math.tanh %81 : vector<16x32xf32>
    %83 = arith.index_cast %c3_i32 : i32 to index
    %84 = memref.load %arg1[%83] : memref<8xf32, #tpu.memory_space<smem>>
    %cst_22 = arith.constant 1.000000e+00 : f32
    %85 = vector.broadcast %cst_22 : f32 to vector<16x32xf32>
    %86 = arith.subf %85, %80 : vector<16x32xf32>
    %87 = vector.broadcast %84 : f32 to vector<16x32xf32>
    %88 = arith.mulf %87, %86 : vector<16x32xf32>
    %89 = arith.mulf %88, %82 : vector<16x32xf32>
    %90 = arith.addf %68, %89 : vector<16x32xf32>
    %c4_i32 = arith.constant 4 : i32
    %91 = arith.index_cast %c4_i32 : i32 to index
    %c0_23 = arith.constant 0 : index
    %c0_24 = arith.constant 0 : index
    %92 = vector.load %arg3[%91, %c0_23, %c0_24] : memref<8x16x64xf32, #tpu.memory_space<vmem>>, vector<1x16x64xf32>
    %93 = vector.shape_cast %92 : vector<1x16x64xf32> to vector<16x64xf32>
    %cst_25 = arith.constant dense<0.000000e+00> : vector<16x64xf32>
    %94 = tpu.matmul %0, %93, %cst_25 {dimension_numbers = #tpu.dot_dimension_numbers<[1], [0], [0], [1], [0, 0, 1, 1], [], []>} : vector<16x16xf32>, vector<16x64xf32>, vector<16x64xf32> -> vector<16x64xf32>
    %95 = vector.broadcast %1 : vector<1x64xf32> to vector<16x64xf32>
    %96 = arith.addf %94, %95 : vector<16x64xf32>
    %97 = vector.extract_strided_slice %96 {offsets = [0, 0], sizes = [16, 32], strides = [1, 1]} : vector<16x64xf32> to vector<16x32xf32>
    %98 = arith.negf %97 : vector<16x32xf32>
    %99 = math.exp %98 : vector<16x32xf32>
    %cst_26 = arith.constant 1.000000e+00 : f32
    %100 = vector.broadcast %cst_26 : f32 to vector<16x32xf32>
    %101 = arith.addf %100, %99 : vector<16x32xf32>
    %102 = arith.divf %100, %101 : vector<16x32xf32>
    %103 = vector.extract_strided_slice %96 {offsets = [0, 32], sizes = [16, 32], strides = [1, 1]} : vector<16x64xf32> to vector<16x32xf32>
    %104 = math.tanh %103 : vector<16x32xf32>
    %105 = arith.index_cast %c4_i32 : i32 to index
    %106 = memref.load %arg1[%105] : memref<8xf32, #tpu.memory_space<smem>>
    %cst_27 = arith.constant 1.000000e+00 : f32
    %107 = vector.broadcast %cst_27 : f32 to vector<16x32xf32>
    %108 = arith.subf %107, %102 : vector<16x32xf32>
    %109 = vector.broadcast %106 : f32 to vector<16x32xf32>
    %110 = arith.mulf %109, %108 : vector<16x32xf32>
    %111 = arith.mulf %110, %104 : vector<16x32xf32>
    %112 = arith.addf %90, %111 : vector<16x32xf32>
    %c5_i32 = arith.constant 5 : i32
    %113 = arith.index_cast %c5_i32 : i32 to index
    %c0_28 = arith.constant 0 : index
    %c0_29 = arith.constant 0 : index
    %114 = vector.load %arg3[%113, %c0_28, %c0_29] : memref<8x16x64xf32, #tpu.memory_space<vmem>>, vector<1x16x64xf32>
    %115 = vector.shape_cast %114 : vector<1x16x64xf32> to vector<16x64xf32>
    %cst_30 = arith.constant dense<0.000000e+00> : vector<16x64xf32>
    %116 = tpu.matmul %0, %115, %cst_30 {dimension_numbers = #tpu.dot_dimension_numbers<[1], [0], [0], [1], [0, 0, 1, 1], [], []>} : vector<16x16xf32>, vector<16x64xf32>, vector<16x64xf32> -> vector<16x64xf32>
    %117 = vector.broadcast %1 : vector<1x64xf32> to vector<16x64xf32>
    %118 = arith.addf %116, %117 : vector<16x64xf32>
    %119 = vector.extract_strided_slice %118 {offsets = [0, 0], sizes = [16, 32], strides = [1, 1]} : vector<16x64xf32> to vector<16x32xf32>
    %120 = arith.negf %119 : vector<16x32xf32>
    %121 = math.exp %120 : vector<16x32xf32>
    %cst_31 = arith.constant 1.000000e+00 : f32
    %122 = vector.broadcast %cst_31 : f32 to vector<16x32xf32>
    %123 = arith.addf %122, %121 : vector<16x32xf32>
    %124 = arith.divf %122, %123 : vector<16x32xf32>
    %125 = vector.extract_strided_slice %118 {offsets = [0, 32], sizes = [16, 32], strides = [1, 1]} : vector<16x64xf32> to vector<16x32xf32>
    %126 = math.tanh %125 : vector<16x32xf32>
    %127 = arith.index_cast %c5_i32 : i32 to index
    %128 = memref.load %arg1[%127] : memref<8xf32, #tpu.memory_space<smem>>
    %cst_32 = arith.constant 1.000000e+00 : f32
    %129 = vector.broadcast %cst_32 : f32 to vector<16x32xf32>
    %130 = arith.subf %129, %124 : vector<16x32xf32>
    %131 = vector.broadcast %128 : f32 to vector<16x32xf32>
    %132 = arith.mulf %131, %130 : vector<16x32xf32>
    %133 = arith.mulf %132, %126 : vector<16x32xf32>
    %134 = arith.addf %112, %133 : vector<16x32xf32>
    %c6_i32 = arith.constant 6 : i32
    %135 = arith.index_cast %c6_i32 : i32 to index
    %c0_33 = arith.constant 0 : index
    %c0_34 = arith.constant 0 : index
    %136 = vector.load %arg3[%135, %c0_33, %c0_34] : memref<8x16x64xf32, #tpu.memory_space<vmem>>, vector<1x16x64xf32>
    %137 = vector.shape_cast %136 : vector<1x16x64xf32> to vector<16x64xf32>
    %cst_35 = arith.constant dense<0.000000e+00> : vector<16x64xf32>
    %138 = tpu.matmul %0, %137, %cst_35 {dimension_numbers = #tpu.dot_dimension_numbers<[1], [0], [0], [1], [0, 0, 1, 1], [], []>} : vector<16x16xf32>, vector<16x64xf32>, vector<16x64xf32> -> vector<16x64xf32>
    %139 = vector.broadcast %1 : vector<1x64xf32> to vector<16x64xf32>
    %140 = arith.addf %138, %139 : vector<16x64xf32>
    %141 = vector.extract_strided_slice %140 {offsets = [0, 0], sizes = [16, 32], strides = [1, 1]} : vector<16x64xf32> to vector<16x32xf32>
    %142 = arith.negf %141 : vector<16x32xf32>
    %143 = math.exp %142 : vector<16x32xf32>
    %cst_36 = arith.constant 1.000000e+00 : f32
    %144 = vector.broadcast %cst_36 : f32 to vector<16x32xf32>
    %145 = arith.addf %144, %143 : vector<16x32xf32>
    %146 = arith.divf %144, %145 : vector<16x32xf32>
    %147 = vector.extract_strided_slice %140 {offsets = [0, 32], sizes = [16, 32], strides = [1, 1]} : vector<16x64xf32> to vector<16x32xf32>
    %148 = math.tanh %147 : vector<16x32xf32>
    %149 = arith.index_cast %c6_i32 : i32 to index
    %150 = memref.load %arg1[%149] : memref<8xf32, #tpu.memory_space<smem>>
    %cst_37 = arith.constant 1.000000e+00 : f32
    %151 = vector.broadcast %cst_37 : f32 to vector<16x32xf32>
    %152 = arith.subf %151, %146 : vector<16x32xf32>
    %153 = vector.broadcast %150 : f32 to vector<16x32xf32>
    %154 = arith.mulf %153, %152 : vector<16x32xf32>
    %155 = arith.mulf %154, %148 : vector<16x32xf32>
    %156 = arith.addf %134, %155 : vector<16x32xf32>
    %c7_i32 = arith.constant 7 : i32
    %157 = arith.index_cast %c7_i32 : i32 to index
    %c0_38 = arith.constant 0 : index
    %c0_39 = arith.constant 0 : index
    %158 = vector.load %arg3[%157, %c0_38, %c0_39] : memref<8x16x64xf32, #tpu.memory_space<vmem>>, vector<1x16x64xf32>
    %159 = vector.shape_cast %158 : vector<1x16x64xf32> to vector<16x64xf32>
    %cst_40 = arith.constant dense<0.000000e+00> : vector<16x64xf32>
    %160 = tpu.matmul %0, %159, %cst_40 {dimension_numbers = #tpu.dot_dimension_numbers<[1], [0], [0], [1], [0, 0, 1, 1], [], []>} : vector<16x16xf32>, vector<16x64xf32>, vector<16x64xf32> -> vector<16x64xf32>
    %161 = vector.broadcast %1 : vector<1x64xf32> to vector<16x64xf32>
    %162 = arith.addf %160, %161 : vector<16x64xf32>
    %163 = vector.extract_strided_slice %162 {offsets = [0, 0], sizes = [16, 32], strides = [1, 1]} : vector<16x64xf32> to vector<16x32xf32>
    %164 = arith.negf %163 : vector<16x32xf32>
    %165 = math.exp %164 : vector<16x32xf32>
    %cst_41 = arith.constant 1.000000e+00 : f32
    %166 = vector.broadcast %cst_41 : f32 to vector<16x32xf32>
    %167 = arith.addf %166, %165 : vector<16x32xf32>
    %168 = arith.divf %166, %167 : vector<16x32xf32>
    %169 = vector.extract_strided_slice %162 {offsets = [0, 32], sizes = [16, 32], strides = [1, 1]} : vector<16x64xf32> to vector<16x32xf32>
    %170 = math.tanh %169 : vector<16x32xf32>
    %171 = arith.index_cast %c7_i32 : i32 to index
    %172 = memref.load %arg1[%171] : memref<8xf32, #tpu.memory_space<smem>>
    %cst_42 = arith.constant 1.000000e+00 : f32
    %173 = vector.broadcast %cst_42 : f32 to vector<16x32xf32>
    %174 = arith.subf %173, %168 : vector<16x32xf32>
    %175 = vector.broadcast %172 : f32 to vector<16x32xf32>
    %176 = arith.mulf %175, %174 : vector<16x32xf32>
    %177 = arith.mulf %176, %170 : vector<16x32xf32>
    %178 = arith.addf %156, %177 : vector<16x32xf32>
    %c8_i32 = arith.constant 8 : i32
    %cst_43 = arith.constant 0.000000e+00 : f32
    %179 = vector.broadcast %cst_43 : f32 to vector<16x32xf32>
    %180 = arith.cmpf oge, %178, %179 : vector<16x32xf32>
    %cst_44 = arith.constant 0.00999999977 : f32
    %181 = vector.broadcast %cst_44 : f32 to vector<16x32xf32>
    %182 = arith.mulf %181, %178 : vector<16x32xf32>
    %183 = arith.select %180, %178, %182 : vector<16x32xi1>, vector<16x32xf32>
    %c0_45 = arith.constant 0 : index
    %c0_46 = arith.constant 0 : index
    %184 = vector.load %arg5[%c0_45, %c0_46] : memref<32x128xf32, #tpu.memory_space<vmem>>, vector<32x128xf32>
    %cst_47 = arith.constant dense<0.000000e+00> : vector<16x128xf32>
    %185 = tpu.matmul %183, %184, %cst_47 {dimension_numbers = #tpu.dot_dimension_numbers<[1], [0], [0], [1], [0, 0, 1, 1], [], []>} : vector<16x32xf32>, vector<32x128xf32>, vector<16x128xf32> -> vector<16x128xf32>
    %c0_48 = arith.constant 0 : index
    %c0_49 = arith.constant 0 : index
    %186 = vector.load %arg6[%c0_48, %c0_49] : memref<1x128xf32, #tpu.memory_space<vmem>>, vector<1x128xf32>
    %187 = vector.broadcast %186 : vector<1x128xf32> to vector<16x128xf32>
    %188 = arith.addf %185, %187 : vector<16x128xf32>
    %c0_50 = arith.constant 0 : index
    %c0_51 = arith.constant 0 : index
    %189 = vector.load %arg7[%c0_50, %c0_51] : memref<16x128xf32, #tpu.memory_space<vmem>>, vector<16x128xf32>
    tpu.vector_store %arg7[%c0_50, %c0_51], %188 {strides = array<i32>} : memref<16x128xf32, #tpu.memory_space<vmem>>, vector<16x128xf32>,
    return
  }
  func.func @transform_0(%arg0: i32, %arg1: memref<8xf32, #tpu.memory_space<smem>>) -> (i32, i32) {
    %c0_i32 = arith.constant 0 : i32
    %c0_i32_0 = arith.constant 0 : i32
    return %arg0, %c0_i32 : i32, i32
  }
  func.func @transform_1(%arg0: i32, %arg1: memref<8xf32, #tpu.memory_space<smem>>) -> (i32, i32, i32) {
    %c0_i32 = arith.constant 0 : i32
    %c0_i32_0 = arith.constant 0 : i32
    %c0_i32_1 = arith.constant 0 : i32
    %c0_i32_2 = arith.constant 0 : i32
    return %c0_i32, %c0_i32_0, %c0_i32_1 : i32, i32, i32
  }
  func.func @transform_2(%arg0: i32, %arg1: memref<8xf32, #tpu.memory_space<smem>>) -> (i32, i32) {
    %c0_i32 = arith.constant 0 : i32
    %c0_i32_0 = arith.constant 0 : i32
    %c0_i32_1 = arith.constant 0 : i32
    return %c0_i32, %c0_i32_0 : i32, i32
  }
  func.func @transform_3(%arg0: i32, %arg1: memref<8xf32, #tpu.memory_space<smem>>) -> (i32, i32) {
    %c0_i32 = arith.constant 0 : i32
    %c0_i32_0 = arith.constant 0 : i32
    %c0_i32_1 = arith.constant 0 : i32
    return %c0_i32, %c0_i32_0 : i32, i32
  }
  func.func @transform_4(%arg0: i32, %arg1: memref<8xf32, #tpu.memory_space<smem>>) -> (i32, i32) {
    %c0_i32 = arith.constant 0 : i32
    %c0_i32_0 = arith.constant 0 : i32
    %c0_i32_1 = arith.constant 0 : i32
    return %c0_i32, %c0_i32_0 : i32, i32
  }
  func.func @transform_5(%arg0: i32, %arg1: memref<8xf32, #tpu.memory_space<smem>>) -> (i32, i32) {
    %c0_i32 = arith.constant 0 : i32
    %c0_i32_0 = arith.constant 0 : i32
    return %arg0, %c0_i32 : i32, i32
  }
}

</mosaic_0001>

<llo_original>
// kernel: tpu_custom_call.1
$region0: #{tpu_custom_call.1}
  #allocation0 [shape = 'u32[]', space=smem, size = 0x4, offset = 0x4, fixed_abs, tag = 'smem constant byte address 0x4 - core index']
  #allocation1 [shape = 'u32[144,128]{1,0:T(1,128)}', space=vmem, size = 0x12000, scoped, tag = 'internal scratch']
  #allocation2 [shape = 's32[1]{0}', space=sflag, size = 0x4, scoped, tag = 'scoped memory for tpu_custom_call.1']
  #allocation3 [shape = 'u8[512]{0}', space=smem, size = 0x200, scoped, tag = 'prefetched SMEM operand 0']
  %s0 = inlined_call_operand.hbm [shape: f32[8], index: 0, kind: input, shape index: {}]
  %s1 = inlined_call_operand.hbm [shape: f32[16,16], index: 1, kind: input, shape index: {}]
  %s2 = inlined_call_operand.hbm [shape: f32[8,16,64], index: 2, kind: input, shape index: {}]
  %s3 = inlined_call_operand.vmem [shape: f32[1,64], index: 3, kind: input, shape index: {}]
  %s4 = inlined_call_operand.hbm [shape: f32[32,128], index: 4, kind: input, shape index: {}]
  %s5 = inlined_call_operand.vmem [shape: f32[1,128], index: 5, kind: input, shape index: {}]
  %s6 = inlined_call_operand.hbm [shape: f32[16,128], index: 6, kind: output, shape index: {}]
  %s7 = sld [smem:[#allocation0]]
  $region42: #{tpu_custom_call.1} parent=0
    _
  %s9 = ssub.s32 1, %s7
  %s10 = scalar_select 0, %s9, %s7
  %12 = dma.hbm_to_smem %s0, 16, [#allocation3], [#allocation2]
  %13 = dma.done [#allocation2], 16
  %14 = sfence
  $region1: #{tpu_custom_call.1} parent=0
    #allocation4 [shape = 'u8[8192]{0}', space=vmem, size = 0x2000, scoped, tag = 'input window, operand 1, single buffered']
    #allocation5 [shape = 's32[1]{0}', space=sflag, size = 0x4, scoped, tag = 'scoped memory for tpu_custom_call.1']
    #allocation6 [shape = 's32[1]{0}', space=sflag, size = 0x4, scoped, tag = 'scoped memory for tpu_custom_call.1']
    #allocation7 [shape = 'u8[65536]{0}', space=vmem, size = 0x10000, scoped, tag = 'input window, operand 2, single buffered']
    #allocation8 [shape = 's32[1]{0}', space=sflag, size = 0x4, scoped, tag = 'scoped memory for tpu_custom_call.1']
    #allocation9 [shape = 'u8[16384]{0}', space=vmem, size = 0x4000, scoped, tag = 'input window, operand 4, single buffered']
    #allocation10 [shape = 'u8[8192]{0}', space=vmem, size = 0x2000, scoped, tag = 'output window, operand 0, single buffered']
    %15 = vsyncpa [#allocation5], 0
    %16 = vsyncpa [#allocation8], 0
    %17 = vsyncpa [#allocation6], 0
    // Predicated region
    $region2: #{tpu_custom_call.1} parent=1 // pred_check
      _
    $region3: #{tpu_custom_call.1} parent=1 // pred_check_branch
      %19 = sbr.rel (0) target = $region5
    $region4: #{tpu_custom_call.1} parent=1 // pred_region
      %s21 = ssub.s32 256, 256
      %22 = vsyncadd [#allocation5], %s21
      %s23 = sshll.u32 [#allocation4], 4
      %s24 = int_to_ptr.vmem [resolvable:$true] %s23
      %29 = dma.hbm_to_vmem [thread:$0]  %s1, 256, %s24, [#allocation5], 128, 128, 8
    $region5: #{tpu_custom_call.1} parent=1 // pred_fallthru
      _
    // Predicated region
    $region6: #{tpu_custom_call.1} parent=1 // pred_check
      _
    $region7: #{tpu_custom_call.1} parent=1 // pred_check_branch
      %31 = sbr.rel (0) target = $region9
    $region8: #{tpu_custom_call.1} parent=1 // pred_region
      %s33 = ssub.s32 2048, 2048
      %34 = vsyncadd [#allocation8], %s33
      %s35 = sshll.u32 [#allocation7], 4
      %s36 = int_to_ptr.vmem [resolvable:$true] %s35
      %41 = dma.hbm_to_vmem [thread:$0]  %s2, 2048, %s36, [#allocation8], 128, 128, 8
    $region9: #{tpu_custom_call.1} parent=1 // pred_fallthru
      _
    // Predicated region
    $region10: #{tpu_custom_call.1} parent=1 // pred_check
      _
    $region11: #{tpu_custom_call.1} parent=1 // pred_check_branch
      %43 = sbr.rel (0) target = $region13
    $region12: #{tpu_custom_call.1} parent=1 // pred_region
      _
    $region13: #{tpu_custom_call.1} parent=1 // pred_fallthru
      _
    // Predicated region
    $region14: #{tpu_custom_call.1} parent=1 // pred_check
      _
    $region15: #{tpu_custom_call.1} parent=1 // pred_check_branch
      %45 = sbr.rel (0) target = $region17
    $region16: #{tpu_custom_call.1} parent=1 // pred_region
      %s47 = ssub.s32 512, 512
      %48 = vsyncadd [#allocation8], %s47
      %s49 = sshll.u32 [#allocation9], 4
      %s50 = int_to_ptr.vmem [resolvable:$true] %s49
      %55 = dma.hbm_to_vmem [thread:$0]  %s4, 512, %s50, [#allocation8], 128, 128, 8
    $region17: #{tpu_custom_call.1} parent=1 // pred_fallthru
      _
    // Predicated region
    $region18: #{tpu_custom_call.1} parent=1 // pred_check
      _
    $region19: #{tpu_custom_call.1} parent=1 // pred_check_branch
      %57 = sbr.rel (0) target = $region21
    $region20: #{tpu_custom_call.1} parent=1 // pred_region
      _
    $region21: #{tpu_custom_call.1} parent=1 // pred_fallthru
      _
    // Predicated region
    $region22: #{tpu_custom_call.1} parent=1 // pred_check
      _
    $region23: #{tpu_custom_call.1} parent=1 // pred_check_branch
      %59 = sbr.rel (0) target = $region25
    $region24: #{tpu_custom_call.1} parent=1 // pred_region
      %60 = dma.done [#allocation5], 256
    $region25: #{tpu_custom_call.1} parent=1 // pred_fallthru
      _
    // Predicated region
    $region26: #{tpu_custom_call.1} parent=1 // pred_check
      _
    $region27: #{tpu_custom_call.1} parent=1 // pred_check_branch
      %62 = sbr.rel (0) target = $region29
    $region28: #{tpu_custom_call.1} parent=1 // pred_region
      %63 = dma.done [#allocation8], 2048
    $region29: #{tpu_custom_call.1} parent=1 // pred_fallthru
      _
    // Predicated region
    $region30: #{tpu_custom_call.1} parent=1 // pred_check
      _
    $region31: #{tpu_custom_call.1} parent=1 // pred_check_branch
      %65 = sbr.rel (0) target = $region33
    $region32: #{tpu_custom_call.1} parent=1 // pred_region
      %66 = dma.done [#allocation8], 512
    $region33: #{tpu_custom_call.1} parent=1 // pred_fallthru
      _
    %v67 = vld [vmem:[#allocation4] sm:$0xff]
    %v68 = vld [vmem:[#allocation4 + $0x8] sm:$0xff]
    %v69 = vld [vmem:[%s3] sm:$0x1]
    %v70 = vld [vmem:[#allocation7] sm:$0xff]
    %v71 = vld [vmem:[#allocation7 + $0x8] sm:$0xff]
    %v73 = vlaneseq
    %v74 = vshrl.u32 %v73, 7
    %v75 = vsub.s32 0, %v74
    %v76 = vrot.slane %v69, %v75
    %vm78 = vcmask 130048
    %v80 = vsel %vm78, %v67, 0
    %v83 = vsel %vm78, %v68, 0
    %85 = vmatprep.subr.mxu0 0.0
    %86 = vmatpush1.msra.mxu0 %v70
    %87 = vmatprep.subr.mxu0 0.0
    %88 = vmatpush1.msra.mxu0 %v71
    %89 = vmatprep.subr.mxu0 0.0
    %90 = vmatpush1.msra.mxu0 0.0
    %91 = vmatprep.subr.mxu0 0.0
    %92 = vmatpush1.msra.mxu0 0.0
    %93 = vmatprep.subr.mxu0 0.0
    %94 = vmatpush1.msra.mxu0 0.0
    %95 = vmatprep.subr.mxu0 0.0
    %96 = vmatpush1.msra.mxu0 0.0
    %97 = vmatprep.subr.mxu0 0.0
    %98 = vmatpush1.msra.mxu0 0.0
    %99 = vmatprep.subr.mxu0 0.0
    %100 = vmatpush1.msra.mxu0 0.0
    %101 = vmatprep.subr.mxu0 0.0
    %102 = vmatpush1.msra.mxu0 0.0
    %103 = vmatprep.subr.mxu0 0.0
    %104 = vmatpush1.msra.mxu0 0.0
    %105 = vmatprep.subr.mxu0 0.0
    %106 = vmatpush1.msra.mxu0 0.0
    %107 = vmatprep.subr.mxu0 0.0
    %108 = vmatpush1.msra.mxu0 0.0
    %109 = vmatprep.subr.mxu0 0.0
    %110 = vmatpush1.msra.mxu0 0.0
    %111 = vmatprep.subr.mxu0 0.0
    %112 = vmatpush1.msra.mxu0 0.0
    %113 = vmatprep.subr.mxu0 0.0
    %114 = vmatpush1.msra.mxu0 0.0
    %115 = vmatprep.subr.mxu0 0.0
    %116 = vmatpush1.msra.mxu0 0.0
    %117 = vmatprep.subr.mxu0 0.0
    %118 = vmatpush1.msra.mxu0 0.0
    %119 = vmatprep.subr.mxu0 0.0
    %120 = vmatpush1.msra.mxu0 0.0
    %121 = vmatprep.subr.mxu0 0.0
    %122 = vmatpush1.msra.mxu0 0.0
    %123 = vmatprep.subr.mxu0 0.0
    %124 = vmatpush1.msra.mxu0 0.0
    %125 = vmatprep.subr.mxu0 0.0
    %126 = vmatpush1.msra.mxu0 0.0
    %127 = vmatprep.subr.mxu0 0.0
    %128 = vmatpush1.msra.mxu0 0.0
    %129 = vmatprep.subr.mxu0 0.0
    %130 = vmatpush1.msra.mxu0 0.0
    %131 = vmatprep.subr.mxu0 0.0
    %132 = vmatpush1.msra.mxu0 0.0
    %133 = vmatprep.subr.mxu0 0.0
    %134 = vmatpush1.msra.mxu0 0.0
    %135 = vmatprep.subr.mxu0 0.0
    %136 = vmatpush1.msra.mxu0 0.0
    %137 = vmatprep.subr.mxu0 0.0
    %138 = vmatpush1.msra.mxu0 0.0
    %139 = vmatprep.subr.mxu0 0.0
    %140 = vmatpush1.msra.mxu0 0.0
    %141 = vmatprep.subr.mxu0 0.0
    %142 = vmatpush1.msra.mxu0 0.0
    %143 = vmatprep.subr.mxu0 0.0
    %144 = vmatpush1.msra.mxu0 0.0
    %145 = vmatprep.subr.mxu0 0.0
    %146 = vmatpush1.msra.mxu0 0.0
    %147 = vmatprep.subr.mxu0 0.0
    %148 = vmatpush1.msra.mxu0 0.0
    %149 = vmatprep.mubr.f32.mxu0 0.0
    %150 = vmatmul.mubr.f32.gmra.mrb[0].mxu0 %v80
    %v151 = vpop.f32.mrb[0].mxu0
    %v152 = vadd.f32 %v76, %v151
    %v153 = vpop.f32.mrb[0].mxu0
    %154 = vmatprep.mubr.f32.mxu0 0.0
    %155 = vmatmul.mubr.f32.gmra.mrb[0].mxu0 %v83
    %v156 = vpop.f32.mrb[0].mxu0
    %v157 = vadd.f32 %v76, %v156
    %v158 = vpop.f32.mrb[0].mxu0
    %159 = vdwg.mxu0
    %v160 = vxor.u32 %v152, 2147483648
    %v161 = vxor.u32 %v157, 2147483648
    %v162 = vmul.f32 %v160, 1.442695
    %v163 = vpow.pop %v162
    %v164 = vmul.f32 %v161, 1.442695
    %v165 = vpow.pop %v164
    %v166 = vadd.f32 %v163, 1.0
    %v167 = vadd.f32 %v165, 1.0
    %v168 = vrcp.pop %v166
    %v169 = vmul.f32 1.0, %v168
    %v170 = vrcp.pop %v167
    %v171 = vmul.f32 1.0, %v170
    %v172 = vtanh.pop %v152
    %v173 = vtanh.pop %v157
    %s174 = sld [smem:[#allocation3]]
    %v175 = vsub.f32 1.0, %v169
    %v176 = vsub.f32 1.0, %v171
    %v177 = vstv %s174
    %v178 = vmul.f32 %v177, %v175
    %v179 = vmul.f32 %v177, %v176
    %182 = vrot.lane.b32.xlu0 %v172, 96
    %v183 = vpop.permute.xlu0 %182
    %184 = vrot.lane.b32.xlu0 %v173, 96
    %v185 = vpop.permute.xlu0 %184
    %v188 = vmul.f32 %v178, %v183
    %v189 = vmul.f32 %v179, %v185
    %v190 = vadd.f32 %v188, 0.0
    %v191 = vadd.f32 %v189, 0.0
    %s192 = scalar_lea.vmem [#allocation7], 16
    %v193 = vld [vmem:[%s192] sm:$0xff]
    %v194 = vld [vmem:[%s192 + $0x8] sm:$0xff]
    %195 = vmatprep.subr.mxu0 0.0
    %196 = vmatpush1.msra.mxu0 %v193
    %197 = vmatprep.subr.mxu0 0.0
    %198 = vmatpush1.msra.mxu0 %v194
    %199 = vmatprep.subr.mxu0 0.0
    %200 = vmatpush1.msra.mxu0 0.0
    %201 = vmatprep.subr.mxu0 0.0
    %202 = vmatpush1.msra.mxu0 0.0
    %203 = vmatprep.subr.mxu0 0.0
    %204 = vmatpush1.msra.mxu0 0.0
    %205 = vmatprep.subr.mxu0 0.0
    %206 = vmatpush1.msra.mxu0 0.0
    %207 = vmatprep.subr.mxu0 0.0
    %208 = vmatpush1.msra.mxu0 0.0
    %209 = vmatprep.subr.mxu0 0.0
    %210 = vmatpush1.msra.mxu0 0.0
    %211 = vmatprep.subr.mxu0 0.0
    %212 = vmatpush1.msra.mxu0 0.0
    %213 = vmatprep.subr.mxu0 0.0
    %214 = vmatpush1.msra.mxu0 0.0
    %215 = vmatprep.subr.mxu0 0.0
    %216 = vmatpush1.msra.mxu0 0.0
    %217 = vmatprep.subr.mxu0 0.0
    %218 = vmatpush1.msra.mxu0 0.0
    %219 = vmatprep.subr.mxu0 0.0
    %220 = vmatpush1.msra.mxu0 0.0
    %221 = vmatprep.subr.mxu0 0.0
    %222 = vmatpush1.msra.mxu0 0.0
    %223 = vmatprep.subr.mxu0 0.0
    %224 = vmatpush1.msra.mxu0 0.0
    %225 = vmatprep.subr.mxu0 0.0
    %226 = vmatpush1.msra.mxu0 0.0
    %227 = vmatprep.subr.mxu0 0.0
    %228 = vmatpush1.msra.mxu0 0.0
    %229 = vmatprep.subr.mxu0 0.0
    %230 = vmatpush1.msra.mxu0 0.0
    %231 = vmatprep.subr.mxu0 0.0
    %232 = vmatpush1.msra.mxu0 0.0
    %233 = vmatprep.subr.mxu0 0.0
    %234 = vmatpush1.msra.mxu0 0.0
    %235 = vmatprep.subr.mxu0 0.0
    %236 = vmatpush1.msra.mxu0 0.0
    %237 = vmatprep.subr.mxu0 0.0
    %238 = vmatpush1.msra.mxu0 0.0
    %239 = vmatprep.subr.mxu0 0.0
    %240 = vmatpush1.msra.mxu0 0.0
    %241 = vmatprep.subr.mxu0 0.0
    %242 = vmatpush1.msra.mxu0 0.0
    %243 = vmatprep.subr.mxu0 0.0
    %244 = vmatpush1.msra.mxu0 0.0
    %245 = vmatprep.subr.mxu0 0.0
    %246 = vmatpush1.msra.mxu0 0.0
    %247 = vmatprep.subr.mxu0 0.0
    %248 = vmatpush1.msra.mxu0 0.0
    %249 = vmatprep.subr.mxu0 0.0
    %250 = vmatpush1.msra.mxu0 0.0
    %251 = vmatprep.subr.mxu0 0.0
    %252 = vmatpush1.msra.mxu0 0.0
    %253 = vmatprep.subr.mxu0 0.0
    %254 = vmatpush1.msra.mxu0 0.0
    %255 = vmatprep.subr.mxu0 0.0
    %256 = vmatpush1.msra.mxu0 0.0
    %257 = vmatprep.subr.mxu0 0.0
    %258 = vmatpush1.msra.mxu0 0.0
    %259 = vmatprep.mubr.f32.mxu0 0.0
    %260 = vmatmul.mubr.f32.gmra.mrb[0].mxu0 %v80
    %v261 = vpop.f32.mrb[0].mxu0
    %v262 = vadd.f32 %v76, %v261
    %v263 = vpop.f32.mrb[0].mxu0
    %264 = vmatprep.mubr.f32.mxu0 0.0
    %265 = vmatmul.mubr.f32.gmra.mrb[0].mxu0 %v83
    %v266 = vpop.f32.mrb[0].mxu0
    %v267 = vadd.f32 %v76, %v266
    %v268 = vpop.f32.mrb[0].mxu0
    %269 = vdwg.mxu0
    %v270 = vxor.u32 %v262, 2147483648
    %v271 = vxor.u32 %v267, 2147483648
    %v272 = vmul.f32 %v270, 1.442695
    %v273 = vpow.pop %v272
    %v274 = vmul.f32 %v271, 1.442695
    %v275 = vpow.pop %v274
    %v276 = vadd.f32 %v273, 1.0
    %v277 = vadd.f32 %v275, 1.0
    %v278 = vrcp.pop %v276
    %v279 = vmul.f32 1.0, %v278
    %v280 = vrcp.pop %v277
    %v281 = vmul.f32 1.0, %v280
    %v282 = vtanh.pop %v262
    %v283 = vtanh.pop %v267
    %s284 = sld [smem:[#allocation3 + $0x1]]
    %v285 = vsub.f32 1.0, %v279
    %v286 = vsub.f32 1.0, %v281
    %v287 = vstv %s284
    %v288 = vmul.f32 %v287, %v285
    %v289 = vmul.f32 %v287, %v286
    %292 = vrot.lane.b32.xlu0 %v282, 96
    %v293 = vpop.permute.xlu0 %292
    %294 = vrot.lane.b32.xlu0 %v283, 96
    %v295 = vpop.permute.xlu0 %294
    %v298 = vmul.f32 %v288, %v293
    %v299 = vmul.f32 %v289, %v295
    %v300 = vadd.f32 %v190, %v298
    %v301 = vadd.f32 %v191, %v299
    %s302 = scalar_lea.vmem [#allocation7], 32
    %v303 = vld [vmem:[%s302] sm:$0xff]
    %v304 = vld [vmem:[%s302 + $0x8] sm:$0xff]
    %305 = vmatprep.subr.mxu0 0.0
    %306 = vmatpush1.msra.mxu0 %v303
    %307 = vmatprep.subr.mxu0 0.0
    %308 = vmatpush1.msra.mxu0 %v304
    %309 = vmatprep.subr.mxu0 0.0
    %310 = vmatpush1.msra.mxu0 0.0
    %311 = vmatprep.subr.mxu0 0.0
    %312 = vmatpush1.msra.mxu0 0.0
    %313 = vmatprep.subr.mxu0 0.0
    %314 = vmatpush1.msra.mxu0 0.0
    %315 = vmatprep.subr.mxu0 0.0
    %316 = vmatpush1.msra.mxu0 0.0
    %317 = vmatprep.subr.mxu0 0.0
    %318 = vmatpush1.msra.mxu0 0.0
    %319 = vmatprep.subr.mxu0 0.0
    %320 = vmatpush1.msra.mxu0 0.0
    %321 = vmatprep.subr.mxu0 0.0
    %322 = vmatpush1.msra.mxu0 0.0
    %323 = vmatprep.subr.mxu0 0.0
    %324 = vmatpush1.msra.mxu0 0.0
    %325 = vmatprep.subr.mxu0 0.0
    %326 = vmatpush1.msra.mxu0 0.0
    %327 = vmatprep.subr.mxu0 0.0
    %328 = vmatpush1.msra.mxu0 0.0
    %329 = vmatprep.subr.mxu0 0.0
    %330 = vmatpush1.msra.mxu0 0.0
    %331 = vmatprep.subr.mxu0 0.0
    %332 = vmatpush1.msra.mxu0 0.0
    %333 = vmatprep.subr.mxu0 0.0
    %334 = vmatpush1.msra.mxu0 0.0
    %335 = vmatprep.subr.mxu0 0.0
    %336 = vmatpush1.msra.mxu0 0.0
    %337 = vmatprep.subr.mxu0 0.0
    %338 = vmatpush1.msra.mxu0 0.0
    %339 = vmatprep.subr.mxu0 0.0
    %340 = vmatpush1.msra.mxu0 0.0
    %341 = vmatprep.subr.mxu0 0.0
    %342 = vmatpush1.msra.mxu0 0.0
    %343 = vmatprep.subr.mxu0 0.0
    %344 = vmatpush1.msra.mxu0 0.0
    %345 = vmatprep.subr.mxu0 0.0
    %346 = vmatpush1.msra.mxu0 0.0
    %347 = vmatprep.subr.mxu0 0.0
    %348 = vmatpush1.msra.mxu0 0.0
    %349 = vmatprep.subr.mxu0 0.0
    %350 = vmatpush1.msra.mxu0 0.0
    %351 = vmatprep.subr.mxu0 0.0
    %352 = vmatpush1.msra.mxu0 0.0
    %353 = vmatprep.subr.mxu0 0.0
    %354 = vmatpush1.msra.mxu0 0.0
    %355 = vmatprep.subr.mxu0 0.0
    %356 = vmatpush1.msra.mxu0 0.0
    %357 = vmatprep.subr.mxu0 0.0
    %358 = vmatpush1.msra.mxu0 0.0
    %359 = vmatprep.subr.mxu0 0.0
    %360 = vmatpush1.msra.mxu0 0.0
    %361 = vmatprep.subr.mxu0 0.0
    %362 = vmatpush1.msra.mxu0 0.0
    %363 = vmatprep.subr.mxu0 0.0
    %364 = vmatpush1.msra.mxu0 0.0
    %365 = vmatprep.subr.mxu0 0.0
    %366 = vmatpush1.msra.mxu0 0.0
    %367 = vmatprep.subr.mxu0 0.0
    %368 = vmatpush1.msra.mxu0 0.0
    %369 = vmatprep.mubr.f32.mxu0 0.0
    %370 = vmatmul.mubr.f32.gmra.mrb[0].mxu0 %v80
    %v371 = vpop.f32.mrb[0].mxu0
    %v372 = vadd.f32 %v76, %v371
    %v373 = vpop.f32.mrb[0].mxu0
    %374 = vmatprep.mubr.f32.mxu0 0.0
    %375 = vmatmul.mubr.f32.gmra.mrb[0].mxu0 %v83
    %v376 = vpop.f32.mrb[0].mxu0
    %v377 = vadd.f32 %v76, %v376
    %v378 = vpop.f32.mrb[0].mxu0
    %379 = vdwg.mxu0
    %v380 = vxor.u32 %v372, 2147483648
    %v381 = vxor.u32 %v377, 2147483648
    %v382 = vmul.f32 %v380, 1.442695
    %v383 = vpow.pop %v382
    %v384 = vmul.f32 %v381, 1.442695
    %v385 = vpow.pop %v384
    %v386 = vadd.f32 %v383, 1.0
    %v387 = vadd.f32 %v385, 1.0
    %v388 = vrcp.pop %v386
    %v389 = vmul.f32 1.0, %v388
    %v390 = vrcp.pop %v387
    %v391 = vmul.f32 1.0, %v390
    %v392 = vtanh.pop %v372
    %v393 = vtanh.pop %v377
    %s394 = sld [smem:[#allocation3 + $0x2]]
    %v395 = vsub.f32 1.0, %v389
    %v396 = vsub.f32 1.0, %v391
    %v397 = vstv %s394
    %v398 = vmul.f32 %v397, %v395
    %v399 = vmul.f32 %v397, %v396
    %402 = vrot.lane.b32.xlu0 %v392, 96
    %v403 = vpop.permute.xlu0 %402
    %404 = vrot.lane.b32.xlu0 %v393, 96
    %v405 = vpop.permute.xlu0 %404
    %v408 = vmul.f32 %v398, %v403
    %v409 = vmul.f32 %v399, %v405
    %v410 = vadd.f32 %v300, %v408
    %v411 = vadd.f32 %v301, %v409
    %s412 = scalar_lea.vmem [#allocation7], 48
    %v413 = vld [vmem:[%s412] sm:$0xff]
    %v414 = vld [vmem:[%s412 + $0x8] sm:$0xff]
    %415 = vmatprep.subr.mxu0 0.0
    %416 = vmatpush1.msra.mxu0 %v413
    %417 = vmatprep.subr.mxu0 0.0
    %418 = vmatpush1.msra.mxu0 %v414
    %419 = vmatprep.subr.mxu0 0.0
    %420 = vmatpush1.msra.mxu0 0.0
    %421 = vmatprep.subr.mxu0 0.0
    %422 = vmatpush1.msra.mxu0 0.0
    %423 = vmatprep.subr.mxu0 0.0
    %424 = vmatpush1.msra.mxu0 0.0
    %425 = vmatprep.subr.mxu0 0.0
    %426 = vmatpush1.msra.mxu0 0.0
    %427 = vmatprep.subr.mxu0 0.0
    %428 = vmatpush1.msra.mxu0 0.0
    %429 = vmatprep.subr.mxu0 0.0
    %430 = vmatpush1.msra.mxu0 0.0
    %431 = vmatprep.subr.mxu0 0.0
    %432 = vmatpush1.msra.mxu0 0.0
    %433 = vmatprep.subr.mxu0 0.0
    %434 = vmatpush1.msra.mxu0 0.0
    %435 = vmatprep.subr.mxu0 0.0
    %436 = vmatpush1.msra.mxu0 0.0
    %437 = vmatprep.subr.mxu0 0.0
    %438 = vmatpush1.msra.mxu0 0.0
    %439 = vmatprep.subr.mxu0 0.0
    %440 = vmatpush1.msra.mxu0 0.0
    %441 = vmatprep.subr.mxu0 0.0
    %442 = vmatpush1.msra.mxu0 0.0
    %443 = vmatprep.subr.mxu0 0.0
    %444 = vmatpush1.msra.mxu0 0.0
    %445 = vmatprep.subr.mxu0 0.0
    %446 = vmatpush1.msra.mxu0 0.0
    %447 = vmatprep.subr.mxu0 0.0
    %448 = vmatpush1.msra.mxu0 0.0
    %449 = vmatprep.subr.mxu0 0.0
    %450 = vmatpush1.msra.mxu0 0.0
    %451 = vmatprep.subr.mxu0 0.0
    %452 = vmatpush1.msra.mxu0 0.0
    %453 = vmatprep.subr.mxu0 0.0
    %454 = vmatpush1.msra.mxu0 0.0
    %455 = vmatprep.subr.mxu0 0.0
    %456 = vmatpush1.msra.mxu0 0.0
    %457 = vmatprep.subr.mxu0 0.0
    %458 = vmatpush1.msra.mxu0 0.0
    %459 = vmatprep.subr.mxu0 0.0
    %460 = vmatpush1.msra.mxu0 0.0
    %461 = vmatprep.subr.mxu0 0.0
    %462 = vmatpush1.msra.mxu0 0.0
    %463 = vmatprep.subr.mxu0 0.0
    %464 = vmatpush1.msra.mxu0 0.0
    %465 = vmatprep.subr.mxu0 0.0
    %466 = vmatpush1.msra.mxu0 0.0
    %467 = vmatprep.subr.mxu0 0.0
    %468 = vmatpush1.msra.mxu0 0.0
    %469 = vmatprep.subr.mxu0 0.0
    %470 = vmatpush1.msra.mxu0 0.0
    %471 = vmatprep.subr.mxu0 0.0
    %472 = vmatpush1.msra.mxu0 0.0
    %473 = vmatprep.subr.mxu0 0.0
    %474 = vmatpush1.msra.mxu0 0.0
    %475 = vmatprep.subr.mxu0 0.0
    %476 = vmatpush1.msra.mxu0 0.0
    %477 = vmatprep.subr.mxu0 0.0
    %478 = vmatpush1.msra.mxu0 0.0
    %479 = vmatprep.mubr.f32.mxu0 0.0
    %480 = vmatmul.mubr.f32.gmra.mrb[0].mxu0 %v80
    %v481 = vpop.f32.mrb[0].mxu0
    %v482 = vadd.f32 %v76, %v481
    %v483 = vpop.f32.mrb[0].mxu0
    %484 = vmatprep.mubr.f32.mxu0 0.0
    %485 = vmatmul.mubr.f32.gmra.mrb[0].mxu0 %v83
    %v486 = vpop.f32.mrb[0].mxu0
    %v487 = vadd.f32 %v76, %v486
    %v488 = vpop.f32.mrb[0].mxu0
    %489 = vdwg.mxu0
    %v490 = vxor.u32 %v482, 2147483648
    %v491 = vxor.u32 %v487, 2147483648
    %v492 = vmul.f32 %v490, 1.442695
    %v493 = vpow.pop %v492
    %v494 = vmul.f32 %v491, 1.442695
    %v495 = vpow.pop %v494
    %v496 = vadd.f32 %v493, 1.0
    %v497 = vadd.f32 %v495, 1.0
    %v498 = vrcp.pop %v496
    %v499 = vmul.f32 1.0, %v498
    %v500 = vrcp.pop %v497
    %v501 = vmul.f32 1.0, %v500
    %v502 = vtanh.pop %v482
    %v503 = vtanh.pop %v487
    %s504 = sld [smem:[#allocation3 + $0x3]]
    %v505 = vsub.f32 1.0, %v499
    %v506 = vsub.f32 1.0, %v501
    %v507 = vstv %s504
    %v508 = vmul.f32 %v507, %v505
    %v509 = vmul.f32 %v507, %v506
    %512 = vrot.lane.b32.xlu0 %v502, 96
    %v513 = vpop.permute.xlu0 %512
    %514 = vrot.lane.b32.xlu0 %v503, 96
    %v515 = vpop.permute.xlu0 %514
    %v518 = vmul.f32 %v508, %v513
    %v519 = vmul.f32 %v509, %v515
    %v520 = vadd.f32 %v410, %v518
    %v521 = vadd.f32 %v411, %v519
    %s522 = scalar_lea.vmem [#allocation7], 64
    %v523 = vld [vmem:[%s522] sm:$0xff]
    %v524 = vld [vmem:[%s522 + $0x8] sm:$0xff]
    %525 = vmatprep.subr.mxu0 0.0
    %526 = vmatpush1.msra.mxu0 %v523
    %527 = vmatprep.subr.mxu0 0.0
    %528 = vmatpush1.msra.mxu0 %v524
    %529 = vmatprep.subr.mxu0 0.0
    %530 = vmatpush1.msra.mxu0 0.0
    %531 = vmatprep.subr.mxu0 0.0
    %532 = vmatpush1.msra.mxu0 0.0
    %533 = vmatprep.subr.mxu0 0.0
    %534 = vmatpush1.msra.mxu0 0.0
    %535 = vmatprep.subr.mxu0 0.0
    %536 = vmatpush1.msra.mxu0 0.0
    %537 = vmatprep.subr.mxu0 0.0
    %538 = vmatpush1.msra.mxu0 0.0
    %539 = vmatprep.subr.mxu0 0.0
    %540 = vmatpush1.msra.mxu0 0.0
    %541 = vmatprep.subr.mxu0 0.0
    %542 = vmatpush1.msra.mxu0 0.0
    %543 = vmatprep.subr.mxu0 0.0
    %544 = vmatpush1.msra.mxu0 0.0
    %545 = vmatprep.subr.mxu0 0.0
    %546 = vmatpush1.msra.mxu0 0.0
    %547 = vmatprep.subr.mxu0 0.0
    %548 = vmatpush1.msra.mxu0 0.0
    %549 = vmatprep.subr.mxu0 0.0
    %550 = vmatpush1.msra.mxu0 0.0
    %551 = vmatprep.subr.mxu0 0.0
    %552 = vmatpush1.msra.mxu0 0.0
    %553 = vmatprep.subr.mxu0 0.0
    %554 = vmatpush1.msra.mxu0 0.0
    %555 = vmatprep.subr.mxu0 0.0
    %556 = vmatpush1.msra.mxu0 0.0
    %557 = vmatprep.subr.mxu0 0.0
    %558 = vmatpush1.msra.mxu0 0.0
    %559 = vmatprep.subr.mxu0 0.0
    %560 = vmatpush1.msra.mxu0 0.0
    %561 = vmatprep.subr.mxu0 0.0
    %562 = vmatpush1.msra.mxu0 0.0
    %563 = vmatprep.subr.mxu0 0.0
    %564 = vmatpush1.msra.mxu0 0.0
    %565 = vmatprep.subr.mxu0 0.0
    %566 = vmatpush1.msra.mxu0 0.0
    %567 = vmatprep.subr.mxu0 0.0
    %568 = vmatpush1.msra.mxu0 0.0
    %569 = vmatprep.subr.mxu0 0.0
    %570 = vmatpush1.msra.mxu0 0.0
    %571 = vmatprep.subr.mxu0 0.0
    %572 = vmatpush1.msra.mxu0 0.0
    %573 = vmatprep.subr.mxu0 0.0
    %574 = vmatpush1.msra.mxu0 0.0
    %575 = vmatprep.subr.mxu0 0.0
    %576 = vmatpush1.msra.mxu0 0.0
    %577 = vmatprep.subr.mxu0 0.0
    %578 = vmatpush1.msra.mxu0 0.0
    %579 = vmatprep.subr.mxu0 0.0
    %580 = vmatpush1.msra.mxu0 0.0
    %581 = vmatprep.subr.mxu0 0.0
    %582 = vmatpush1.msra.mxu0 0.0
    %583 = vmatprep.subr.mxu0 0.0
    %584 = vmatpush1.msra.mxu0 0.0
    %585 = vmatprep.subr.mxu0 0.0
    %586 = vmatpush1.msra.mxu0 0.0
    %587 = vmatprep.subr.mxu0 0.0
    %588 = vmatpush1.msra.mxu0 0.0
    %589 = vmatprep.mubr.f32.mxu0 0.0
    %590 = vmatmul.mubr.f32.gmra.mrb[0].mxu0 %v80
    %v591 = vpop.f32.mrb[0].mxu0
    %v592 = vadd.f32 %v76, %v591
    %v593 = vpop.f32.mrb[0].mxu0
    %594 = vmatprep.mubr.f32.mxu0 0.0
    %595 = vmatmul.mubr.f32.gmra.mrb[0].mxu0 %v83
    %v596 = vpop.f32.mrb[0].mxu0
    %v597 = vadd.f32 %v76, %v596
    %v598 = vpop.f32.mrb[0].mxu0
    %599 = vdwg.mxu0
    %v600 = vxor.u32 %v592, 2147483648
    %v601 = vxor.u32 %v597, 2147483648
    %v602 = vmul.f32 %v600, 1.442695
    %v603 = vpow.pop %v602
    %v604 = vmul.f32 %v601, 1.442695
    %v605 = vpow.pop %v604
    %v606 = vadd.f32 %v603, 1.0
    %v607 = vadd.f32 %v605, 1.0
    %v608 = vrcp.pop %v606
    %v609 = vmul.f32 1.0, %v608
    %v610 = vrcp.pop %v607
    %v611 = vmul.f32 1.0, %v610
    %v612 = vtanh.pop %v592
    %v613 = vtanh.pop %v597
    %s614 = sld [smem:[#allocation3 + $0x4]]
    %v615 = vsub.f32 1.0, %v609
    %v616 = vsub.f32 1.0, %v611
    %v617 = vstv %s614
    %v618 = vmul.f32 %v617, %v615
    %v619 = vmul.f32 %v617, %v616
    %622 = vrot.lane.b32.xlu0 %v612, 96
    %v623 = vpop.permute.xlu0 %622
    %624 = vrot.lane.b32.xlu0 %v613, 96
    %v625 = vpop.permute.xlu0 %624
    %v628 = vmul.f32 %v618, %v623
    %v629 = vmul.f32 %v619, %v625
    %v630 = vadd.f32 %v520, %v628
    %v631 = vadd.f32 %v521, %v629
    %s632 = scalar_lea.vmem [#allocation7], 80
    %v633 = vld [vmem:[%s632] sm:$0xff]
    %v634 = vld [vmem:[%s632 + $0x8] sm:$0xff]
    %635 = vmatprep.subr.mxu0 0.0
    %636 = vmatpush1.msra.mxu0 %v633
    %637 = vmatprep.subr.mxu0 0.0
    %638 = vmatpush1.msra.mxu0 %v634
    %639 = vmatprep.subr.mxu0 0.0
    %640 = vmatpush1.msra.mxu0 0.0
    %641 = vmatprep.subr.mxu0 0.0
    %642 = vmatpush1.msra.mxu0 0.0
    %643 = vmatprep.subr.mxu0 0.0
    %644 = vmatpush1.msra.mxu0 0.0
    %645 = vmatprep.subr.mxu0 0.0
    %646 = vmatpush1.msra.mxu0 0.0
    %647 = vmatprep.subr.mxu0 0.0
    %648 = vmatpush1.msra.mxu0 0.0
    %649 = vmatprep.subr.mxu0 0.0
    %650 = vmatpush1.msra.mxu0 0.0
    %651 = vmatprep.subr.mxu0 0.0
    %652 = vmatpush1.msra.mxu0 0.0
    %653 = vmatprep.subr.mxu0 0.0
    %654 = vmatpush1.msra.mxu0 0.0
    %655 = vmatprep.subr.mxu0 0.0
    %656 = vmatpush1.msra.mxu0 0.0
    %657 = vmatprep.subr.mxu0 0.0
    %658 = vmatpush1.msra.mxu0 0.0
    %659 = vmatprep.subr.mxu0 0.0
    %660 = vmatpush1.msra.mxu0 0.0
    %661 = vmatprep.subr.mxu0 0.0
    %662 = vmatpush1.msra.mxu0 0.0
    %663 = vmatprep.subr.mxu0 0.0
    %664 = vmatpush1.msra.mxu0 0.0
    %665 = vmatprep.subr.mxu0 0.0
    %666 = vmatpush1.msra.mxu0 0.0
    %667 = vmatprep.subr.mxu0 0.0
    %668 = vmatpush1.msra.mxu0 0.0
    %669 = vmatprep.subr.mxu0 0.0
    %670 = vmatpush1.msra.mxu0 0.0
    %671 = vmatprep.subr.mxu0 0.0
    %672 = vmatpush1.msra.mxu0 0.0
    %673 = vmatprep.subr.mxu0 0.0
    %674 = vmatpush1.msra.mxu0 0.0
    %675 = vmatprep.subr.mxu0 0.0
    %676 = vmatpush1.msra.mxu0 0.0
    %677 = vmatprep.subr.mxu0 0.0
    %678 = vmatpush1.msra.mxu0 0.0
    %679 = vmatprep.subr.mxu0 0.0
    %680 = vmatpush1.msra.mxu0 0.0
    %681 = vmatprep.subr.mxu0 0.0
    %682 = vmatpush1.msra.mxu0 0.0
    %683 = vmatprep.subr.mxu0 0.0
    %684 = vmatpush1.msra.mxu0 0.0
    %685 = vmatprep.subr.mxu0 0.0
    %686 = vmatpush1.msra.mxu0 0.0
    %687 = vmatprep.subr.mxu0 0.0
    %688 = vmatpush1.msra.mxu0 0.0
    %689 = vmatprep.subr.mxu0 0.0
    %690 = vmatpush1.msra.mxu0 0.0
    %691 = vmatprep.subr.mxu0 0.0
    %692 = vmatpush1.msra.mxu0 0.0
    %693 = vmatprep.subr.mxu0 0.0
    %694 = vmatpush1.msra.mxu0 0.0
    %695 = vmatprep.subr.mxu0 0.0
    %696 = vmatpush1.msra.mxu0 0.0
    %697 = vmatprep.subr.mxu0 0.0
    %698 = vmatpush1.msra.mxu0 0.0
    %699 = vmatprep.mubr.f32.mxu0 0.0
    %700 = vmatmul.mubr.f32.gmra.mrb[0].mxu0 %v80
    %v701 = vpop.f32.mrb[0].mxu0
    %v702 = vadd.f32 %v76, %v701
    %v703 = vpop.f32.mrb[0].mxu0
    %704 = vmatprep.mubr.f32.mxu0 0.0
    %705 = vmatmul.mubr.f32.gmra.mrb[0].mxu0 %v83
    %v706 = vpop.f32.mrb[0].mxu0
    %v707 = vadd.f32 %v76, %v706
    %v708 = vpop.f32.mrb[0].mxu0
    %709 = vdwg.mxu0
    %v710 = vxor.u32 %v702, 2147483648
    %v711 = vxor.u32 %v707, 2147483648
    %v712 = vmul.f32 %v710, 1.442695
    %v713 = vpow.pop %v712
    %v714 = vmul.f32 %v711, 1.442695
    %v715 = vpow.pop %v714
    %v716 = vadd.f32 %v713, 1.0
    %v717 = vadd.f32 %v715, 1.0
    %v718 = vrcp.pop %v716
    %v719 = vmul.f32 1.0, %v718
    %v720 = vrcp.pop %v717
    %v721 = vmul.f32 1.0, %v720
    %v722 = vtanh.pop %v702
    %v723 = vtanh.pop %v707
    %s724 = sld [smem:[#allocation3 + $0x5]]
    %v725 = vsub.f32 1.0, %v719
    %v726 = vsub.f32 1.0, %v721
    %v727 = vstv %s724
    %v728 = vmul.f32 %v727, %v725
    %v729 = vmul.f32 %v727, %v726
    %732 = vrot.lane.b32.xlu0 %v722, 96
    %v733 = vpop.permute.xlu0 %732
    %734 = vrot.lane.b32.xlu0 %v723, 96
    %v735 = vpop.permute.xlu0 %734
    %v738 = vmul.f32 %v728, %v733
    %v739 = vmul.f32 %v729, %v735
    %v740 = vadd.f32 %v630, %v738
    %v741 = vadd.f32 %v631, %v739
    %s742 = scalar_lea.vmem [#allocation7], 96
    %v743 = vld [vmem:[%s742] sm:$0xff]
    %v744 = vld [vmem:[%s742 + $0x8] sm:$0xff]
    %745 = vmatprep.subr.mxu0 0.0
    %746 = vmatpush1.msra.mxu0 %v743
    %747 = vmatprep.subr.mxu0 0.0
    %748 = vmatpush1.msra.mxu0 %v744
    %749 = vmatprep.subr.mxu0 0.0
    %750 = vmatpush1.msra.mxu0 0.0
    %751 = vmatprep.subr.mxu0 0.0
    %752 = vmatpush1.msra.mxu0 0.0
    %753 = vmatprep.subr.mxu0 0.0
    %754 = vmatpush1.msra.mxu0 0.0
    %755 = vmatprep.subr.mxu0 0.0
    %756 = vmatpush1.msra.mxu0 0.0
    %757 = vmatprep.subr.mxu0 0.0
    %758 = vmatpush1.msra.mxu0 0.0
    %759 = vmatprep.subr.mxu0 0.0
    %760 = vmatpush1.msra.mxu0 0.0
    %761 = vmatprep.subr.mxu0 0.0
    %762 = vmatpush1.msra.mxu0 0.0
    %763 = vmatprep.subr.mxu0 0.0
    %764 = vmatpush1.msra.mxu0 0.0
    %765 = vmatprep.subr.mxu0 0.0
    %766 = vmatpush1.msra.mxu0 0.0
    %767 = vmatprep.subr.mxu0 0.0
    %768 = vmatpush1.msra.mxu0 0.0
    %769 = vmatprep.subr.mxu0 0.0
    %770 = vmatpush1.msra.mxu0 0.0
    %771 = vmatprep.subr.mxu0 0.0
    %772 = vmatpush1.msra.mxu0 0.0
    %773 = vmatprep.subr.mxu0 0.0
    %774 = vmatpush1.msra.mxu0 0.0
    %775 = vmatprep.subr.mxu0 0.0
    %776 = vmatpush1.msra.mxu0 0.0
    %777 = vmatprep.subr.mxu0 0.0
    %778 = vmatpush1.msra.mxu0 0.0
    %779 = vmatprep.subr.mxu0 0.0
    %780 = vmatpush1.msra.mxu0 0.0
    %781 = vmatprep.subr.mxu0 0.0
    %782 = vmatpush1.msra.mxu0 0.0
    %783 = vmatprep.subr.mxu0 0.0
    %784 = vmatpush1.msra.mxu0 0.0
    %785 = vmatprep.subr.mxu0 0.0
    %786 = vmatpush1.msra.mxu0 0.0
    %787 = vmatprep.subr.mxu0 0.0
    %788 = vmatpush1.msra.mxu0 0.0
    %789 = vmatprep.subr.mxu0 0.0
    %790 = vmatpush1.msra.mxu0 0.0
    %791 = vmatprep.subr.mxu0 0.0
    %792 = vmatpush1.msra.mxu0 0.0
    %793 = vmatprep.subr.mxu0 0.0
    %794 = vmatpush1.msra.mxu0 0.0
    %795 = vmatprep.subr.mxu0 0.0
    %796 = vmatpush1.msra.mxu0 0.0
    %797 = vmatprep.subr.mxu0 0.0
    %798 = vmatpush1.msra.mxu0 0.0
    %799 = vmatprep.subr.mxu0 0.0
    %800 = vmatpush1.msra.mxu0 0.0
    %801 = vmatprep.subr.mxu0 0.0
    %802 = vmatpush1.msra.mxu0 0.0
    %803 = vmatprep.subr.mxu0 0.0
    %804 = vmatpush1.msra.mxu0 0.0
    %805 = vmatprep.subr.mxu0 0.0
    %806 = vmatpush1.msra.mxu0 0.0
    %807 = vmatprep.subr.mxu0 0.0
    %808 = vmatpush1.msra.mxu0 0.0
    %809 = vmatprep.mubr.f32.mxu0 0.0
    %810 = vmatmul.mubr.f32.gmra.mrb[0].mxu0 %v80
    %v811 = vpop.f32.mrb[0].mxu0
    %v812 = vadd.f32 %v76, %v811
    %v813 = vpop.f32.mrb[0].mxu0
    %814 = vmatprep.mubr.f32.mxu0 0.0
    %815 = vmatmul.mubr.f32.gmra.mrb[0].mxu0 %v83
    %v816 = vpop.f32.mrb[0].mxu0
    %v817 = vadd.f32 %v76, %v816
    %v818 = vpop.f32.mrb[0].mxu0
    %819 = vdwg.mxu0
    %v820 = vxor.u32 %v812, 2147483648
    %v821 = vxor.u32 %v817, 2147483648
    %v822 = vmul.f32 %v820, 1.442695
    %v823 = vpow.pop %v822
    %v824 = vmul.f32 %v821, 1.442695
    %v825 = vpow.pop %v824
    %v826 = vadd.f32 %v823, 1.0
    %v827 = vadd.f32 %v825, 1.0
    %v828 = vrcp.pop %v826
    %v829 = vmul.f32 1.0, %v828
    %v830 = vrcp.pop %v827
    %v831 = vmul.f32 1.0, %v830
    %v832 = vtanh.pop %v812
    %v833 = vtanh.pop %v817
    %s834 = sld [smem:[#allocation3 + $0x6]]
    %v835 = vsub.f32 1.0, %v829
    %v836 = vsub.f32 1.0, %v831
    %v837 = vstv %s834
    %v838 = vmul.f32 %v837, %v835
    %v839 = vmul.f32 %v837, %v836
    %842 = vrot.lane.b32.xlu0 %v832, 96
    %v843 = vpop.permute.xlu0 %842
    %844 = vrot.lane.b32.xlu0 %v833, 96
    %v845 = vpop.permute.xlu0 %844
    %v848 = vmul.f32 %v838, %v843
    %v849 = vmul.f32 %v839, %v845
    %v850 = vadd.f32 %v740, %v848
    %v851 = vadd.f32 %v741, %v849
    %s852 = scalar_lea.vmem [#allocation7], 112
    %v853 = vld [vmem:[%s852] sm:$0xff]
    %v854 = vld [vmem:[%s852 + $0x8] sm:$0xff]
    %855 = vmatprep.subr.mxu0 0.0
    %856 = vmatpush1.msra.mxu0 %v853
    %857 = vmatprep.subr.mxu0 0.0
    %858 = vmatpush1.msra.mxu0 %v854
    %859 = vmatprep.subr.mxu0 0.0
    %860 = vmatpush1.msra.mxu0 0.0
    %861 = vmatprep.subr.mxu0 0.0
    %862 = vmatpush1.msra.mxu0 0.0
    %863 = vmatprep.subr.mxu0 0.0
    %864 = vmatpush1.msra.mxu0 0.0
    %865 = vmatprep.subr.mxu0 0.0
    %866 = vmatpush1.msra.mxu0 0.0
    %867 = vmatprep.subr.mxu0 0.0
    %868 = vmatpush1.msra.mxu0 0.0
    %869 = vmatprep.subr.mxu0 0.0
    %870 = vmatpush1.msra.mxu0 0.0
    %871 = vmatprep.subr.mxu0 0.0
    %872 = vmatpush1.msra.mxu0 0.0
    %873 = vmatprep.subr.mxu0 0.0
    %874 = vmatpush1.msra.mxu0 0.0
    %875 = vmatprep.subr.mxu0 0.0
    %876 = vmatpush1.msra.mxu0 0.0
    %877 = vmatprep.subr.mxu0 0.0
    %878 = vmatpush1.msra.mxu0 0.0
    %879 = vmatprep.subr.mxu0 0.0
    %880 = vmatpush1.msra.mxu0 0.0
    %881 = vmatprep.subr.mxu0 0.0
    %882 = vmatpush1.msra.mxu0 0.0
    %883 = vmatprep.subr.mxu0 0.0
    %884 = vmatpush1.msra.mxu0 0.0
    %885 = vmatprep.subr.mxu0 0.0
    %886 = vmatpush1.msra.mxu0 0.0
    %887 = vmatprep.subr.mxu0 0.0
    %888 = vmatpush1.msra.mxu0 0.0
    %889 = vmatprep.subr.mxu0 0.0
    %890 = vmatpush1.msra.mxu0 0.0
    %891 = vmatprep.subr.mxu0 0.0
    %892 = vmatpush1.msra.mxu0 0.0
    %893 = vmatprep.subr.mxu0 0.0
    %894 = vmatpush1.msra.mxu0 0.0
    %895 = vmatprep.subr.mxu0 0.0
    %896 = vmatpush1.msra.mxu0 0.0
    %897 = vmatprep.subr.mxu0 0.0
    %898 = vmatpush1.msra.mxu0 0.0
    %899 = vmatprep.subr.mxu0 0.0
    %900 = vmatpush1.msra.mxu0 0.0
    %901 = vmatprep.subr.mxu0 0.0
    %902 = vmatpush1.msra.mxu0 0.0
    %903 = vmatprep.subr.mxu0 0.0
    %904 = vmatpush1.msra.mxu0 0.0
    %905 = vmatprep.subr.mxu0 0.0
    %906 = vmatpush1.msra.mxu0 0.0
    %907 = vmatprep.subr.mxu0 0.0
    %908 = vmatpush1.msra.mxu0 0.0
    %909 = vmatprep.subr.mxu0 0.0
    %910 = vmatpush1.msra.mxu0 0.0
    %911 = vmatprep.subr.mxu0 0.0
    %912 = vmatpush1.msra.mxu0 0.0
    %913 = vmatprep.subr.mxu0 0.0
    %914 = vmatpush1.msra.mxu0 0.0
    %915 = vmatprep.subr.mxu0 0.0
    %916 = vmatpush1.msra.mxu0 0.0
    %917 = vmatprep.subr.mxu0 0.0
    %918 = vmatpush1.msra.mxu0 0.0
    %919 = vmatprep.mubr.f32.mxu0 0.0
    %920 = vmatmul.mubr.f32.gmra.mrb[0].mxu0 %v80
    %v921 = vpop.f32.mrb[0].mxu0
    %v922 = vadd.f32 %v76, %v921
    %v923 = vpop.f32.mrb[0].mxu0
    %924 = vmatprep.mubr.f32.mxu0 0.0
    %925 = vmatmul.mubr.f32.gmra.mrb[0].mxu0 %v83
    %v926 = vpop.f32.mrb[0].mxu0
    %v927 = vadd.f32 %v76, %v926
    %v928 = vpop.f32.mrb[0].mxu0
    %929 = vdwg.mxu0
    %v930 = vxor.u32 %v922, 2147483648
    %v931 = vxor.u32 %v927, 2147483648
    %v932 = vmul.f32 %v930, 1.442695
    %v933 = vpow.pop %v932
    %v934 = vmul.f32 %v931, 1.442695
    %v935 = vpow.pop %v934
    %v936 = vadd.f32 %v933, 1.0
    %v937 = vadd.f32 %v935, 1.0
    %v938 = vrcp.pop %v936
    %v939 = vmul.f32 1.0, %v938
    %v940 = vrcp.pop %v937
    %v941 = vmul.f32 1.0, %v940
    %v942 = vtanh.pop %v922
    %v943 = vtanh.pop %v927
    %s944 = sld [smem:[#allocation3 + $0x7]]
    %v945 = vsub.f32 1.0, %v939
    %v946 = vsub.f32 1.0, %v941
    %v947 = vstv %s944
    %v948 = vmul.f32 %v947, %v945
    %v949 = vmul.f32 %v947, %v946
    %952 = vrot.lane.b32.xlu0 %v942, 96
    %v953 = vpop.permute.xlu0 %952
    %954 = vrot.lane.b32.xlu0 %v943, 96
    %v955 = vpop.permute.xlu0 %954
    %v958 = vmul.f32 %v948, %v953
    %v959 = vmul.f32 %v949, %v955
    %v960 = vadd.f32 %v850, %v958
    %v961 = vadd.f32 %v851, %v959
    %vm962 = vcmp.ge.f32.partialorder %v960, 0.0
    %vm963 = vcmp.ge.f32.partialorder %v961, 0.0
    %v964 = vmul.f32 %v960, 0.01
    %v965 = vmul.f32 %v961, 0.01
    %v966 = vsel %vm962, %v960, %v964
    %v967 = vsel %vm963, %v961, %v965
    %v968 = vld [vmem:[#allocation9] sm:$0xff]
    %v969 = vld [vmem:[#allocation9 + $0x8] sm:$0xff]
    %v970 = vld [vmem:[#allocation9 + $0x10] sm:$0xff]
    %v971 = vld [vmem:[#allocation9 + $0x18] sm:$0xff]
    %v972 = vld [vmem:[%s5] sm:$0x1]
    %v974 = vlaneseq
    %v975 = vshrl.u32 %v974, 7
    %v976 = vsub.s32 0, %v975
    %v977 = vrot.slane %v972, %v976
    %vm979 = vcmask 261120
    %v981 = vsel %vm979, %v966, 0
    %v984 = vsel %vm979, %v967, 0
    %986 = vmatprep.subr.mxu0 0.0
    %987 = vmatpush1.msra.mxu0 %v968
    %988 = vmatprep.subr.mxu0 0.0
    %989 = vmatpush1.msra.mxu0 %v969
    %990 = vmatprep.subr.mxu0 0.0
    %991 = vmatpush1.msra.mxu0 %v970
    %992 = vmatprep.subr.mxu0 0.0
    %993 = vmatpush1.msra.mxu0 %v971
    %994 = vmatprep.subr.mxu0 0.0
    %995 = vmatpush1.msra.mxu0 0.0
    %996 = vmatprep.subr.mxu0 0.0
    %997 = vmatpush1.msra.mxu0 0.0
    %998 = vmatprep.subr.mxu0 0.0
    %999 = vmatpush1.msra.mxu0 0.0
    %1000 = vmatprep.subr.mxu0 0.0
    %1001 = vmatpush1.msra.mxu0 0.0
    %1002 = vmatprep.subr.mxu0 0.0
    %1003 = vmatpush1.msra.mxu0 0.0
    %1004 = vmatprep.subr.mxu0 0.0
    %1005 = vmatpush1.msra.mxu0 0.0
    %1006 = vmatprep.subr.mxu0 0.0
    %1007 = vmatpush1.msra.mxu0 0.0
    %1008 = vmatprep.subr.mxu0 0.0
    %1009 = vmatpush1.msra.mxu0 0.0
    %1010 = vmatprep.subr.mxu0 0.0
    %1011 = vmatpush1.msra.mxu0 0.0
    %1012 = vmatprep.subr.mxu0 0.0
    %1013 = vmatpush1.msra.mxu0 0.0
    %1014 = vmatprep.subr.mxu0 0.0
    %1015 = vmatpush1.msra.mxu0 0.0
    %1016 = vmatprep.subr.mxu0 0.0
    %1017 = vmatpush1.msra.mxu0 0.0
    %1018 = vmatprep.subr.mxu0 0.0
    %1019 = vmatpush1.msra.mxu0 0.0
    %1020 = vmatprep.subr.mxu0 0.0
    %1021 = vmatpush1.msra.mxu0 0.0
    %1022 = vmatprep.subr.mxu0 0.0
    %1023 = vmatpush1.msra.mxu0 0.0
    %1024 = vmatprep.subr.mxu0 0.0
    %1025 = vmatpush1.msra.mxu0 0.0
    %1026 = vmatprep.subr.mxu0 0.0
    %1027 = vmatpush1.msra.mxu0 0.0
    %1028 = vmatprep.subr.mxu0 0.0
    %1029 = vmatpush1.msra.mxu0 0.0
    %1030 = vmatprep.subr.mxu0 0.0
    %1031 = vmatpush1.msra.mxu0 0.0
    %1032 = vmatprep.subr.mxu0 0.0
    %1033 = vmatpush1.msra.mxu0 0.0
    %1034 = vmatprep.subr.mxu0 0.0
    %1035 = vmatpush1.msra.mxu0 0.0
    %1036 = vmatprep.subr.mxu0 0.0
    %1037 = vmatpush1.msra.mxu0 0.0
    %1038 = vmatprep.subr.mxu0 0.0
    %1039 = vmatpush1.msra.mxu0 0.0
    %1040 = vmatprep.subr.mxu0 0.0
    %1041 = vmatpush1.msra.mxu0 0.0
    %1042 = vmatprep.subr.mxu0 0.0
    %1043 = vmatpush1.msra.mxu0 0.0
    %1044 = vmatprep.subr.mxu0 0.0
    %1045 = vmatpush1.msra.mxu0 0.0
    %1046 = vmatprep.subr.mxu0 0.0
    %1047 = vmatpush1.msra.mxu0 0.0
    %1048 = vmatprep.subr.mxu0 0.0
    %1049 = vmatpush1.msra.mxu0 0.0
    %1050 = vmatprep.mubr.f32.mxu0 0.0
    %1051 = vmatmul.mubr.f32.gmra.mrb[0].mxu0 %v981
    %v1052 = vpop.f32.mrb[0].mxu0
    %v1053 = vadd.f32 %v977, %v1052
    %v1054 = vpop.f32.mrb[0].mxu0
    %1055 = vmatprep.mubr.f32.mxu0 0.0
    %1056 = vmatmul.mubr.f32.gmra.mrb[0].mxu0 %v984
    %v1057 = vpop.f32.mrb[0].mxu0
    %v1058 = vadd.f32 %v977, %v1057
    %v1059 = vpop.f32.mrb[0].mxu0
    %1060 = vdwg.mxu0
    %1061 = vst [vmem:[#allocation10] sm:$0xff] %v1053
    %1062 = vst [vmem:[#allocation10 + $0x8] sm:$0xff] %v1058
    // Predicated region
    $region34: #{tpu_custom_call.1} parent=1 // pred_check
      _
    $region35: #{tpu_custom_call.1} parent=1 // pred_check_branch
      %1064 = sbr.rel (0) target = $region37
    $region36: #{tpu_custom_call.1} parent=1 // pred_region
      %s1066 = ssub.s32 256, 256
      %1067 = vsyncadd [#allocation6], %s1066
      %s1068 = sshll.u32 [#allocation10], 4
      %s1069 = int_to_ptr.vmem [resolvable:$true] %s1068
      %1074 = dma.vmem_to_hbm [thread:$0]  %s1069, 256, %s6, [#allocation6], 128, 128, 8
    $region37: #{tpu_custom_call.1} parent=1 // pred_fallthru
      _
    // Predicated region
    $region38: #{tpu_custom_call.1} parent=1 // pred_check
      _
    $region39: #{tpu_custom_call.1} parent=1 // pred_check_branch
      %1076 = sbr.rel (0) target = $region41
    $region40: #{tpu_custom_call.1} parent=1 // pred_region
      %1077 = dma.done [#allocation6], 256
    $region41: #{tpu_custom_call.1} parent=1 // pred_fallthru
      _
    %1078 = vsyncpa [#allocation5], 1
    %1079 = vsyncpa [#allocation8], 1
    %1080 = vsyncpa [#allocation6], 1

</llo_original>
